<compile_context>
chip_gen: v6e
topology: v6e:2x2x1
jax: 0.10.0
libtpu: 0.0.40
codegen_flags: <defaults>
</compile_context>

<pallas_src>
import jax
import jax.numpy as jnp
from jax.experimental import pallas as pl
from jax.experimental.pallas import tpu as pltpu

LANES = 128
MAX_TILE_ROWS = 2048   # 2048 x 128 x 4 B = 1 MiB per input block.
_LN2 = 0.6931471805599453


def _round_up(x, m):
    return ((x + m - 1) // m) * m


def _logcosh_kernel(n_ref, t_ref, p_ref, out_ref):
    """Per-tile per-lane partial sums of log(cosh(true - pred + 1e-12))."""
    i = pl.program_id(0)
    last = pl.num_programs(0) - 1

    t = t_ref[...].astype(jnp.float32)
    p = p_ref[...].astype(jnp.float32)
    d = jnp.abs(t - p + jnp.float32(1e-12))
    # Overflow-safe identity: log(cosh(x)) = |x| + log(1 + exp(-2|x|)) - log(2).
    val = d + jnp.log(1.0 + jnp.exp(-2.0 * d)) - jnp.float32(_LN2)

    def reduce_and_store(v):
        # Reduce over the sublane/row axis only (mostly plain vreg adds);
        # keep the 128 lanes so the per-step output stays lane-dense.
        out_ref[0] = jnp.sum(v, axis=0, keepdims=True)   # (1, 128)

    # Steady state: every element of a non-last tile is valid -> no mask.
    @pl.when(i < last)
    def _():
        reduce_and_store(val)

    # Last tile only: mask out padded / out-of-bounds tail elements.
    # (Pallas pads boundary blocks; unread padding is unspecified, so mask.)
    @pl.when(i == last)
    def _():
        rows, cols = val.shape
        row_idx = jax.lax.broadcasted_iota(jnp.int32, (rows, cols), 0)
        col_idx = jax.lax.broadcasted_iota(jnp.int32, (rows, cols), 1)
        local = row_idx * cols + col_idx
        # int32 is fine below ~2^31 elements (>8 GiB of f32 on one chip).
        valid_here = n_ref[0] - i * (rows * cols)
        reduce_and_store(jnp.where(local < valid_here, val, 0.0))


def log_cosh_loss(true, pred):
    assert true.shape == pred.shape, "true/pred must have the same shape"
    n_valid = int(true.size)

    t = true.reshape(-1)
    p = pred.reshape(-1)

    # Pad (with a copy) only when the element count is not a lane multiple;
    # padded elements are excluded by the in-kernel mask on the last tile.
    pad = (-n_valid) % LANES
    if pad:
        t = jnp.pad(t, (0, pad))
        p = jnp.pad(p, (0, pad))

    total_rows = t.shape[0] // LANES
    t2 = t.reshape(total_rows, LANES)
    p2 = p.reshape(total_rows, LANES)

    # Largest tile that fits the double-buffered VMEM budget on all TPU gens,
    # clamped down for small inputs so the block never exceeds what is needed.
    tile_rows = max(8, min(MAX_TILE_ROWS, _round_up(total_rows, 8)))
    num_tiles = pl.cdiv(total_rows, tile_rows)

    partials = pl.pallas_call(
        _logcosh_kernel,
        out_shape=jax.ShapeDtypeStruct((num_tiles, 1, LANES), jnp.float32),
        grid_spec=pltpu.PrefetchScalarGridSpec(
            num_scalar_prefetch=1,
            grid=(num_tiles,),
            in_specs=[
                pl.BlockSpec((tile_rows, LANES), lambda i, n: (i, 0)),
                pl.BlockSpec((tile_rows, LANES), lambda i, n: (i, 0)),
            ],
            out_specs=pl.BlockSpec((1, 1, LANES), lambda i, n: (i, 0, 0)),
        ),
        compiler_params=pltpu.CompilerParams(
            dimension_semantics=("parallel",),
        ),
    )(jnp.asarray([n_valid], dtype=jnp.int32), t2, p2)

    # Tiny final reduction over (num_tiles, 1, 128) partial sums.
    return jnp.sum(partials) / jnp.float32(n_valid)


if __name__ == "__main__":
    key = jax.random.PRNGKey(0)
    k1, k2 = jax.random.split(key)
    # Small NCHW-like tensors (the loss is layout-agnostic).
    shape = (2, 4, 16, 16)
    true = jax.random.normal(k1, shape, dtype=jnp.float32)
    pred = jax.random.normal(k2, shape, dtype=jnp.float32)

    loss = log_cosh_loss(true, pred)
    jax.block_until_ready(loss)

    # Pure-JAX reference check (direct translation of the PyTorch module).
    ref = jnp.mean(jnp.log(jnp.cosh(true - pred + 1e-12)))
    assert jnp.allclose(loss, ref, rtol=1e-5, atol=1e-5), (loss, ref)

    print("KERNEL_OK")
</pallas_src>

<mosaic_0001>
module attributes {stable_mosaic.version = 11 : i64} {
  func.func @_logcosh_kernel(%arg0: i32, %arg1: memref<1xi32, #tpu.memory_space<smem>>, %arg2: memref<16x128xf32, #tpu.memory_space<vmem>>, %arg3: memref<16x128xf32, #tpu.memory_space<vmem>>, %arg4: memref<1x1x128xf32, #tpu.memory_space<vmem>>) attributes {dimension_semantics = [#tpu.dimension_semantics<parallel>], iteration_bounds = array<i64: 1>, scalar_prefetch = 1 : i64, scratch_operands = 0 : i64, tpu.core_type = #tpu.core_type<tc>, window_params = [{transform_indices = @transform_0, window_bounds = array<i64: 16, 128>}, {transform_indices = @transform_1, window_bounds = array<i64: 16, 128>}, {transform_indices = @transform_2, window_bounds = array<i64: 1, 1, 128>}]} {
    %c0 = arith.constant 0 : index
    %c0_0 = arith.constant 0 : index
    %0 = vector.load %arg2[%c0, %c0_0] : memref<16x128xf32, #tpu.memory_space<vmem>>, vector<16x128xf32>
    %c0_1 = arith.constant 0 : index
    %c0_2 = arith.constant 0 : index
    %1 = vector.load %arg3[%c0_1, %c0_2] : memref<16x128xf32, #tpu.memory_space<vmem>>, vector<16x128xf32>
    %2 = arith.subf %0, %1 : vector<16x128xf32>
    %cst = arith.constant 9.99999996E-13 : f32
    %3 = vector.broadcast %cst : f32 to vector<16x128xf32>
    %4 = arith.addf %2, %3 : vector<16x128xf32>
    %5 = math.absf %4 : vector<16x128xf32>
    %cst_3 = arith.constant -2.000000e+00 : f32
    %6 = vector.broadcast %cst_3 : f32 to vector<16x128xf32>
    %7 = arith.mulf %6, %5 : vector<16x128xf32>
    %8 = math.exp %7 : vector<16x128xf32>
    %cst_4 = arith.constant 1.000000e+00 : f32
    %9 = vector.broadcast %cst_4 : f32 to vector<16x128xf32>
    %10 = arith.addf %9, %8 : vector<16x128xf32>
    %11 = math.log %10 : vector<16x128xf32>
    %12 = arith.addf %5, %11 : vector<16x128xf32>
    %cst_5 = arith.constant 0.693147182 : f32
    %13 = vector.broadcast %cst_5 : f32 to vector<16x128xf32>
    %14 = arith.subf %12, %13 : vector<16x128xf32>
    %c0_i32 = arith.constant 0 : i32
    %15 = arith.cmpi slt, %arg0, %c0_i32 : i32
    %16 = arith.extui %15 : i1 to i32
    %c0_i32_6 = arith.constant 0 : i32
    %17 = arith.cmpi ne, %16, %c0_i32_6 : i32
    scf.if %17 {
      %cst_9 = arith.constant dense<0.000000e+00> : vector<128xf32>
      %21 = vector.multi_reduction <add>, %14, %cst_9 [0] : vector<16x128xf32> to vector<128xf32>
      %22 = vector.shape_cast %21 : vector<128xf32> to vector<1x128xf32>
      %c0_10 = arith.constant 0 : index
      %c0_11 = arith.constant 0 : index
      %c0_12 = arith.constant 0 : index
      %23 = vector.load %arg4[%c0_10, %c0_11, %c0_12] : memref<1x1x128xf32, #tpu.memory_space<vmem>>, vector<1x1x128xf32>
      %24 = vector.shape_cast %23 : vector<1x1x128xf32> to vector<1x128xf32>
      %25 = vector.shape_cast %22 : vector<1x128xf32> to vector<1x1x128xf32>
      tpu.vector_store %arg4[%c0_10, %c0_11, %c0_12], %25 {strides = array<i32>} : memref<1x1x128xf32, #tpu.memory_space<vmem>>, vector<1x1x128xf32>,
    } else {
    }
    %c0_i32_7 = arith.constant 0 : i32
    %18 = arith.cmpi eq, %arg0, %c0_i32_7 : i32
    %19 = arith.extui %18 : i1 to i32
    %c0_i32_8 = arith.constant 0 : i32
    %20 = arith.cmpi ne, %19, %c0_i32_8 : i32
    scf.if %20 {
      %21 = tpu.iota {dimensions = array<i32: 0>} : vector<16x128xi32>
      %22 = tpu.iota {dimensions = array<i32: 1>} : vector<16x128xi32>
      %c128_i32 = arith.constant 128 : i32
      %23 = vector.broadcast %c128_i32 : i32 to vector<16x128xi32>
      %24 = arith.muli %21, %23 : vector<16x128xi32>
      %25 = arith.addi %24, %22 : vector<16x128xi32>
      %c0_9 = arith.constant 0 : index
      %26 = memref.load %arg1[%c0_9] : memref<1xi32, #tpu.memory_space<smem>>
      %c2048_i32 = arith.constant 2048 : i32
      %27 = arith.muli %arg0, %c2048_i32 : i32
      %28 = arith.subi %26, %27 : i32
      %29 = vector.broadcast %28 : i32 to vector<16x128xi32>
      %30 = arith.cmpi slt, %25, %29 : vector<16x128xi32>
      %cst_10 = arith.constant 0.000000e+00 : f32
      %31 = vector.broadcast %cst_10 : f32 to vector<16x128xf32>
      %32 = arith.select %30, %14, %31 : vector<16x128xi1>, vector<16x128xf32>
      %cst_11 = arith.constant dense<0.000000e+00> : vector<128xf32>
      %33 = vector.multi_reduction <add>, %32, %cst_11 [0] : vector<16x128xf32> to vector<128xf32>
      %34 = vector.shape_cast %33 : vector<128xf32> to vector<1x128xf32>
      %c0_12 = arith.constant 0 : index
      %c0_13 = arith.constant 0 : index
      %c0_14 = arith.constant 0 : index
      %35 = vector.load %arg4[%c0_12, %c0_13, %c0_14] : memref<1x1x128xf32, #tpu.memory_space<vmem>>, vector<1x1x128xf32>
      %36 = vector.shape_cast %35 : vector<1x1x128xf32> to vector<1x128xf32>
      %37 = vector.shape_cast %34 : vector<1x128xf32> to vector<1x1x128xf32>
      tpu.vector_store %arg4[%c0_12, %c0_13, %c0_14], %37 {strides = array<i32>} : memref<1x1x128xf32, #tpu.memory_space<vmem>>, vector<1x1x128xf32>,
    } else {
    }
    return
  }
  func.func @transform_0(%arg0: i32, %arg1: memref<1xi32, #tpu.memory_space<smem>>) -> (i32, i32) {
    %c0_i32 = arith.constant 0 : i32
    %c0_i32_0 = arith.constant 0 : i32
    return %arg0, %c0_i32 : i32, i32
  }
  func.func @transform_1(%arg0: i32, %arg1: memref<1xi32, #tpu.memory_space<smem>>) -> (i32, i32) {
    %c0_i32 = arith.constant 0 : i32
    %c0_i32_0 = arith.constant 0 : i32
    return %arg0, %c0_i32 : i32, i32
  }
  func.func @transform_2(%arg0: i32, %arg1: memref<1xi32, #tpu.memory_space<smem>>) -> (i32, i32, i32) {
    %c0_i32 = arith.constant 0 : i32
    %c0_i32_0 = arith.constant 0 : i32
    %c0_i32_1 = arith.constant 0 : i32
    return %arg0, %c0_i32, %c0_i32_0 : i32, i32, i32
  }
}

</mosaic_0001>

<llo_original>
// kernel: tpu_custom_call.1
$region0: #{tpu_custom_call.1}
  #allocation0 [shape = 'u32[]', space=smem, size = 0x4, offset = 0x4, fixed_abs, tag = 'smem constant byte address 0x4 - core index']
  #allocation1 [shape = 'u32[144,128]{1,0:T(1,128)}', space=vmem, size = 0x12000, scoped, tag = 'internal scratch']
  #allocation2 [shape = 's32[1]{0}', space=sflag, size = 0x4, scoped, tag = 'scoped memory for tpu_custom_call.1']
  #allocation3 [shape = 's32[1]{0:T(128)S(6)}', space=smem, size = 0x200, scoped, tag = 'prefetched SMEM operand 0']
  %s0 = inlined_call_operand.<no memory space> [shape: s32[1], index: 0, kind: input, shape index: {}]
  %s1 = inlined_call_operand.hbm [shape: f32[16,128], index: 1, kind: input, shape index: {}]
  %s2 = inlined_call_operand.hbm [shape: f32[16,128], index: 2, kind: input, shape index: {}]
  %s3 = inlined_call_operand.hbm [shape: f32[1,1,128], index: 3, kind: output, shape index: {}]
  %s4 = sld [smem:[#allocation0]]
  $region34: #{tpu_custom_call.1} parent=0
    _
  %s6 = ssub.s32 1, %s4
  %s7 = scalar_select 0, %s6, %s4
  %8 = sst [smem:[#allocation3]] %s0
  $region1: #{tpu_custom_call.1} parent=0
    #allocation4 [shape = 'u8[8192]{0}', space=vmem, size = 0x2000, scoped, tag = 'input window, operand 1, single buffered']
    #allocation5 [shape = 's32[1]{0}', space=sflag, size = 0x4, scoped, tag = 'scoped memory for tpu_custom_call.1']
    #allocation6 [shape = 's32[1]{0}', space=sflag, size = 0x4, scoped, tag = 'scoped memory for tpu_custom_call.1']
    #allocation7 [shape = 'u8[8192]{0}', space=vmem, size = 0x2000, scoped, tag = 'input window, operand 2, single buffered']
    #allocation8 [shape = 's32[1]{0}', space=sflag, size = 0x4, scoped, tag = 'scoped memory for tpu_custom_call.1']
    #allocation9 [shape = 'u8[512]{0}', space=vmem, size = 0x400, scoped, tag = 'output window, operand 0, single buffered']
    %9 = vsyncpa [#allocation5], 0
    %10 = vsyncpa [#allocation8], 0
    %11 = vsyncpa [#allocation6], 0
    // Predicated region
    $region2: #{tpu_custom_call.1} parent=1 // pred_check
      _
    $region3: #{tpu_custom_call.1} parent=1 // pred_check_branch
      %13 = sbr.rel (0) target = $region5
    $region4: #{tpu_custom_call.1} parent=1 // pred_region
      %s15 = ssub.s32 256, 256
      %16 = vsyncadd [#allocation5], %s15
      %s17 = sshll.u32 [#allocation4], 4
      %s18 = int_to_ptr.vmem [resolvable:$true] %s17
      %23 = dma.hbm_to_vmem [thread:$0]  %s1, 256, %s18, [#allocation5], 128, 128, 8
    $region5: #{tpu_custom_call.1} parent=1 // pred_fallthru
      _
    // Predicated region
    $region6: #{tpu_custom_call.1} parent=1 // pred_check
      _
    $region7: #{tpu_custom_call.1} parent=1 // pred_check_branch
      %25 = sbr.rel (0) target = $region9
    $region8: #{tpu_custom_call.1} parent=1 // pred_region
      %s27 = ssub.s32 256, 256
      %28 = vsyncadd [#allocation8], %s27
      %s29 = sshll.u32 [#allocation7], 4
      %s30 = int_to_ptr.vmem [resolvable:$true] %s29
      %35 = dma.hbm_to_vmem [thread:$0]  %s2, 256, %s30, [#allocation8], 128, 128, 8
    $region9: #{tpu_custom_call.1} parent=1 // pred_fallthru
      _
    // Predicated region
    $region10: #{tpu_custom_call.1} parent=1 // pred_check
      _
    $region11: #{tpu_custom_call.1} parent=1 // pred_check_branch
      %37 = sbr.rel (0) target = $region13
    $region12: #{tpu_custom_call.1} parent=1 // pred_region
      %38 = dma.done [#allocation5], 256
    $region13: #{tpu_custom_call.1} parent=1 // pred_fallthru
      _
    // Predicated region
    $region14: #{tpu_custom_call.1} parent=1 // pred_check
      _
    $region15: #{tpu_custom_call.1} parent=1 // pred_check_branch
      %40 = sbr.rel (0) target = $region17
    $region16: #{tpu_custom_call.1} parent=1 // pred_region
      %41 = dma.done [#allocation8], 256
    $region17: #{tpu_custom_call.1} parent=1 // pred_fallthru
      _
    %v42 = vld [vmem:[#allocation4] sm:$0xff]
    %v43 = vld [vmem:[#allocation4 + $0x8] sm:$0xff]
    %v44 = vld [vmem:[#allocation7] sm:$0xff]
    %v45 = vld [vmem:[#allocation7 + $0x8] sm:$0xff]
    %v46 = vsub.f32 %v42, %v44
    %v47 = vsub.f32 %v43, %v45
    %v48 = vadd.f32 %v46, 1e-12
    %v49 = vadd.f32 %v47, 1e-12
    %v50 = vand.u32 2147483647, %v48
    %v51 = vand.u32 2147483647, %v49
    %v52 = vmul.f32 %v50, -2.0
    %v53 = vmul.f32 %v51, -2.0
    %v54 = vmul.f32 %v52, 1.442695
    %v55 = vpow.pop %v54
    %v56 = vmul.f32 %v53, 1.442695
    %v57 = vpow.pop %v56
    %v58 = vadd.f32 %v55, 1.0
    %v59 = vadd.f32 %v57, 1.0
    %v60 = vlog2.pop %v58
    %v61 = vmul.f32 %v60, 0.6931472
    %v62 = vlog2.pop %v59
    %v63 = vmul.f32 %v62, 0.6931472
    %v64 = vadd.f32 %v50, %v61
    %v65 = vadd.f32 %v51, %v63
    %v66 = vsub.f32 %v64, 0.6931472
    %v67 = vsub.f32 %v65, 0.6931472
    %p68 = scmp.lt.s32.totalorder 0, 0
    // Predicated region
    $region18: #{tpu_custom_call.1} parent=1 // pred_check
      %p69 = pneg %p68
    $region19: #{tpu_custom_call.1} parent=1 // pred_check_branch
      %71 = sbr.rel (%p69) target = $region21
    $region20: #{tpu_custom_call.1} parent=1 // pred_region
      %v72 = vadd.f32 %v66, %v67
      %v73 = vrot.slane %v72, 4
      %v74 = vadd.f32 %v72, %v73
      %v75 = vrot.slane %v74, 2
      %v76 = vadd.f32 %v74, %v75
      %v77 = vrot.slane %v76, 1
      %v78 = vadd.f32 %v76, %v77
      %79 = vst [vmem:[#allocation9] sm:$0x1] %v78
    $region21: #{tpu_custom_call.1} parent=1 // pred_fallthru
      _
    %p80 = scmp.eq.s32.totalorder 0, 0
    // Predicated region
    $region22: #{tpu_custom_call.1} parent=1 // pred_check
      %p81 = pneg %p80
    $region23: #{tpu_custom_call.1} parent=1 // pred_check_branch
      %83 = sbr.rel (%p81) target = $region25
    $region24: #{tpu_custom_call.1} parent=1 // pred_region
      %v84 = vlaneseq
      %v85 = vshrl.u32 %v84, 7
      %v86 = vadd.s32 %v85, 8
      %v87 = vlaneseq
      %v88 = vand.u32 %v87, 127
      %v89 = vmul.u32 %v85, 128
      %v90 = vmul.u32 %v86, 128
      %v91 = vadd.s32 %v89, %v88
      %v92 = vadd.s32 %v90, %v88
      %s93 = sld [smem:[#allocation3]]
      %s94 = smul.u32 0, 2048
      %s95 = ssub.s32 %s93, %s94
      %v96 = vstv %s95
      %vm97 = vcmp.lt.s32.totalorder %v91, %v96
      %vm98 = vcmp.lt.s32.totalorder %v92, %v96
      %v99 = vsel %vm97, %v66, 0.0
      %v100 = vsel %vm98, %v67, 0.0
      %v101 = vadd.f32 %v99, %v100
      %v102 = vrot.slane %v101, 4
      %v103 = vadd.f32 %v101, %v102
      %v104 = vrot.slane %v103, 2
      %v105 = vadd.f32 %v103, %v104
      %v106 = vrot.slane %v105, 1
      %v107 = vadd.f32 %v105, %v106
      %108 = vst [vmem:[#allocation9] sm:$0x1] %v107
    $region25: #{tpu_custom_call.1} parent=1 // pred_fallthru
      _
    // Predicated region
    $region26: #{tpu_custom_call.1} parent=1 // pred_check
      _
    $region27: #{tpu_custom_call.1} parent=1 // pred_check_branch
      %110 = sbr.rel (0) target = $region29
    $region28: #{tpu_custom_call.1} parent=1 // pred_region
      %s112 = ssub.s32 16, 16
      %113 = vsyncadd [#allocation6], %s112
      %s115 = sshll.u32 [#allocation9], 4
      %s116 = int_to_ptr.vmem [resolvable:$true] %s115
      %118 = dma.vmem_to_hbm [thread:$0]  %s116, 16, %s3, [#allocation6]
    $region29: #{tpu_custom_call.1} parent=1 // pred_fallthru
      _
    // Predicated region
    $region30: #{tpu_custom_call.1} parent=1 // pred_check
      _
    $region31: #{tpu_custom_call.1} parent=1 // pred_check_branch
      %120 = sbr.rel (0) target = $region33
    $region32: #{tpu_custom_call.1} parent=1 // pred_region
      %121 = dma.done [#allocation6], 16
    $region33: #{tpu_custom_call.1} parent=1 // pred_fallthru
      _
    %122 = vsyncpa [#allocation5], 1
    %123 = vsyncpa [#allocation8], 1
    %124 = vsyncpa [#allocation6], 1

</llo_original>
